<compile_context>
chip_gen: v5e
topology: v5e:2x2
jax: 0.10.0
libtpu: 0.0.40
codegen_flags: <defaults>
</compile_context>

<pallas_src>
import functools

import jax
import jax.numpy as jnp
from jax import lax
from jax.experimental import pallas as pl
from jax.experimental.pallas import tpu as pltpu

C_IN = 120
C_OUT = 120
C_PAD = 128            # lane-aligned channel width used inside the kernel
KH = 3                 # kernel_size=(3,1), padding=(1,0) -> "same" along H
LEAKY_SLOPE = 0.01     # PyTorch nn.LeakyReLU default
BN_EPS = 1e-5          # PyTorch nn.BatchNorm2d default


def _conv_bn_lrelu_kernel(x_ref, halo_ref, w_ref, shift_ref, o_ref, *, W):
    """One (batch, H-tile) step of the fused conv + folded-BN + LeakyReLU.

    x_ref    : (1, TH*W, 128)   row-flattened H-tile of the input (compute dtype)
    halo_ref : (1, 1, 2*W, 128) image rows just above / below the tile
                                (zero rows at the image borders -> padding=(1,0))
    w_ref    : (3, 128, 128)    BN-scale-folded conv weights, one matrix per tap
    shift_ref: (1, 128)         f32 folded shift = (bias - mean)*scale + beta
    o_ref    : (1, TH*W, 128)   output tile (lane-dense last dim)
    """
    thw = x_ref.shape[1]
    main = x_ref[0]                     # (TH*W, C): rows h of this tile
    halo = halo_ref[0, 0]               # (2*W, C)
    top = halo[:W]                      # image row h_tile_start - 1
    bot = halo[W:]                      # image row h_tile_end

    # Row-shifted views of the tile (input rows h-1 and h+1).
    x_top = jnp.concatenate([top, main[: thw - W]], axis=0)
    x_bot = jnp.concatenate([main[W:], bot], axis=0)

    # (3,1) conv == three row-shifted (TH*W, C) @ (C, C) MXU matmuls chained
    # into a single f32 accumulator (no zero-init / extra full-tile add).
    acc = jnp.dot(x_top, w_ref[0], preferred_element_type=jnp.float32)
    acc = acc + jnp.dot(main, w_ref[1], preferred_element_type=jnp.float32)
    acc = acc + jnp.dot(x_bot, w_ref[2], preferred_element_type=jnp.float32)

    y = acc + shift_ref[...]                        # folded BN + conv bias (f32)
    y = jnp.maximum(y, LEAKY_SLOPE * y)             # LeakyReLU: mul + max
    o_ref[0] = y.astype(o_ref.dtype)


def _pick_th(H, W):
    """Rows of H per tile: divides H, keeps TH*W sublane-aligned (%8 == 0),
    targets <=2048 output rows per tile and >=2 tiles so the grid pipelines
    and shards across TensorCores."""
    cands = [th for th in range(1, H + 1) if H % th == 0 and (th * W) % 8 == 0]
    if not cands:
        return H                                   # full-extent block (always legal)
    feas = [th for th in cands if th * W <= 2048] or [min(cands)]
    multi = [th for th in feas if H // th >= 2]
    return max(multi) if multi else max(feas)


def fold_bn_params(wk, bias, gamma, beta, run_mean, run_var,
                   *, compute_dtype=jnp.bfloat16):
    """Fold inference BatchNorm into the conv weights + a per-channel shift and
    zero-pad channels 120 -> 128 so every kernel op is lane-dense."""
    scale = gamma / jnp.sqrt(run_var + BN_EPS)                      # (120,)
    w_folded = wk * scale[None, None, :]                            # (3, 120, 120)
    shift = (bias - run_mean) * scale + beta                        # (120,)
    w_p = jnp.pad(w_folded, ((0, 0), (0, C_PAD - C_IN), (0, C_PAD - C_OUT)))
    w_p = w_p.astype(compute_dtype)
    shift_p = jnp.pad(shift, (0, C_PAD - C_OUT)).reshape(1, C_PAD)  # stays f32
    return w_p, shift_p


def conv_block2_forward_nhwc_padded(x_pad, w_p, shift_p, *, out_dtype=None):
    """Chaining entry point.

    x_pad : (N, H, W, 128) activations already in compute dtype with channels
            zero-padded to 128.  Keep this layout (and bf16) between layers so
            the per-layer pad/slice/transpose HBM round trips disappear.
    Returns (N, H, W, 128) in `out_dtype` (defaults to x_pad.dtype -> bf16
    writeback when chaining; only widen to f32 at the network boundary).
    """
    N, H, W, C = x_pad.shape
    assert C == C_PAD
    out_dtype = x_pad.dtype if out_dtype is None else out_dtype

    TH = _pick_th(H, W)
    num_ht = H // TH

    # Tiny per-tile halo rows (one row above + one row below each tile, zero at
    # the image borders) implement padding=(1,0) without materializing a padded
    # copy of the whole activation in HBM.
    zrow = jnp.zeros((N, 1, W, C_PAD), x_pad.dtype)
    if num_ht > 1:
        top = jnp.concatenate([zrow, x_pad[:, TH - 1:H - TH:TH]], axis=1)
        bot = jnp.concatenate([x_pad[:, TH:H - TH + 1:TH], zrow], axis=1)
    else:
        top, bot = zrow, zrow
    halo = jnp.concatenate([top, bot], axis=2)       # (N, num_ht, 2*W, 128)

    x_flat = x_pad.reshape(N, H * W, C_PAD)          # contiguous reshape (free)
    kernel = functools.partial(_conv_bn_lrelu_kernel, W=W)

    out_flat = pl.pallas_call(
        kernel,
        out_shape=jax.ShapeDtypeStruct((N, H * W, C_PAD), out_dtype),
        grid=(N, num_ht),
        in_specs=[
            pl.BlockSpec((1, TH * W, C_PAD), lambda n, h: (n, h, 0)),
            pl.BlockSpec((1, 1, 2 * W, C_PAD), lambda n, h: (n, h, 0, 0)),
            pl.BlockSpec((KH, C_PAD, C_PAD), lambda n, h: (0, 0, 0)),
            pl.BlockSpec((1, C_PAD), lambda n, h: (0, 0)),
        ],
        out_specs=pl.BlockSpec((1, TH * W, C_PAD), lambda n, h: (n, h, 0)),
        compiler_params=pltpu.CompilerParams(
            dimension_semantics=("parallel", "parallel"),
            vmem_limit_bytes=32 * 1024 * 1024),
    )(x_flat, halo, w_p, shift_p)

    return out_flat.reshape(N, H, W, C_PAD)


def conv_block2_forward_nhwc(x_nhwc, wk, bias, gamma, beta, run_mean, run_var,
                             *, compute_dtype=jnp.bfloat16,
                             out_dtype=jnp.float32):
    """(N, H, W, 120) -> (N, H, W, 120) convenience wrapper (single layer)."""
    N, H, W, C = x_nhwc.shape
    assert C == C_IN
    w_p, shift_p = fold_bn_params(wk, bias, gamma, beta, run_mean, run_var,
                                  compute_dtype=compute_dtype)
    x_p = jnp.pad(x_nhwc, ((0, 0), (0, 0), (0, 0),
                           (0, C_PAD - C_IN))).astype(compute_dtype)
    out = conv_block2_forward_nhwc_padded(x_p, w_p, shift_p, out_dtype=out_dtype)
    return out[..., :C_OUT]


def conv_block2_forward(x_nchw, wk, bias, gamma, beta, run_mean, run_var,
                        *, compute_dtype=jnp.bfloat16, out_dtype=jnp.float32):
    """PyTorch-layout wrapper: (N, 120, H, W) -> (N, 120, H, W).

    Prefer conv_block2_forward_nhwc_padded across a stack of layers: these two
    transposes (and the channel pad/slice) are extra HBM round trips that the
    kernel itself avoids.
    """
    N, C, H, W = x_nchw.shape
    assert C == C_IN
    x_nhwc = jnp.transpose(x_nchw, (0, 2, 3, 1))
    out_nhwc = conv_block2_forward_nhwc(x_nhwc, wk, bias, gamma, beta,
                                        run_mean, run_var,
                                        compute_dtype=compute_dtype,
                                        out_dtype=out_dtype)
    return jnp.transpose(out_nhwc, (0, 3, 1, 2))


def _reference(x_nchw, wk, bias, gamma, beta, run_mean, run_var):
    """Pure-JAX reference using lax.conv_general_dilated (NCHW, OIHW)."""
    w_oihw = jnp.transpose(wk, (2, 1, 0))[:, :, :, None]  # (Cout, Cin, 3, 1)
    y = lax.conv_general_dilated(
        x_nchw, w_oihw, window_strides=(1, 1),
        padding=((1, 1), (0, 0)),
        dimension_numbers=("NCHW", "OIHW", "NCHW"))
    y = y + bias[None, :, None, None]
    y = (y - run_mean[None, :, None, None]) / jnp.sqrt(
        run_var + BN_EPS)[None, :, None, None]
    y = y * gamma[None, :, None, None] + beta[None, :, None, None]
    return jnp.where(y > 0, y, LEAKY_SLOPE * y)


if __name__ == "__main__":
    key = jax.random.PRNGKey(0)
    kx, kw, kb, kg, kbe, km, kv = jax.random.split(key, 7)

    N, H, W = 2, 16, 8
    x = jax.random.normal(kx, (N, C_IN, H, W), dtype=jnp.float32)

    # Deterministic synthetic parameters (shapes from the module __init__).
    fan_in = C_IN * KH * 1
    bound = 1.0 / (fan_in ** 0.5)
    wk = jax.random.uniform(kw, (KH, C_IN, C_OUT), jnp.float32, -bound, bound)
    bias = jax.random.uniform(kb, (C_OUT,), jnp.float32, -bound, bound)
    gamma = jax.random.uniform(kg, (C_OUT,), jnp.float32, 0.5, 1.5)
    beta = 0.1 * jax.random.normal(kbe, (C_OUT,), jnp.float32)
    run_mean = 0.1 * jax.random.normal(km, (C_OUT,), jnp.float32)
    run_var = jax.random.uniform(kv, (C_OUT,), jnp.float32, 0.5, 1.5)

    ref = _reference(x, wk, bias, gamma, beta, run_mean, run_var)

    # f32 matmul path: tight check against the reference.
    out_f32 = conv_block2_forward(x, wk, bias, gamma, beta, run_mean, run_var,
                                  compute_dtype=jnp.float32,
                                  out_dtype=jnp.float32)
    out_f32 = jax.block_until_ready(out_f32)
    assert out_f32.shape == (N, C_OUT, H, W)
    assert jnp.allclose(out_f32, ref, atol=5e-3, rtol=5e-3)

    # Default bf16 matmul inputs (f32 accumulation, f32 boundary output).
    out_bf16 = conv_block2_forward(x, wk, bias, gamma, beta, run_mean, run_var)
    out_bf16 = jax.block_until_ready(out_bf16)
    assert out_bf16.shape == (N, C_OUT, H, W)
    assert jnp.allclose(out_bf16, ref, atol=3e-2, rtol=3e-2)

    # Chained / padded-layout path: bf16 in, bf16 out, channels kept at 128.
    w_p, shift_p = fold_bn_params(wk, bias, gamma, beta, run_mean, run_var)
    x_nhwc = jnp.transpose(x, (0, 2, 3, 1))
    x_pad = jnp.pad(x_nhwc, ((0, 0), (0, 0), (0, 0),
                             (0, C_PAD - C_IN))).astype(jnp.bfloat16)
    out_chain = conv_block2_forward_nhwc_padded(x_pad, w_p, shift_p)
    out_chain = jax.block_until_ready(out_chain)
    assert out_chain.shape == (N, H, W, C_PAD)
    ref_nhwc = jnp.transpose(ref, (0, 2, 3, 1))
    assert jnp.allclose(out_chain[..., :C_OUT].astype(jnp.float32), ref_nhwc,
                        atol=6e-2, rtol=6e-2)

    print("KERNEL_OK")
</pallas_src>

<mosaic_0001>
module attributes {stable_mosaic.version = 11 : i64} {
  func.func @_conv_bn_lrelu_kernel(%arg0: i32, %arg1: i32, %arg2: memref<1x64x128xf32, #tpu.memory_space<vmem>>, %arg3: memref<1x1x16x128xf32, #tpu.memory_space<vmem>>, %arg4: memref<3x128x128xf32, #tpu.memory_space<vmem>>, %arg5: memref<1x128xf32, #tpu.memory_space<vmem>>, %arg6: memref<1x64x128xf32, #tpu.memory_space<vmem>>) attributes {dimension_semantics = [#tpu.dimension_semantics<parallel>, #tpu.dimension_semantics<parallel>], iteration_bounds = array<i64: 2, 2>, scalar_prefetch = 0 : i64, scratch_operands = 0 : i64, tpu.core_type = #tpu.core_type<tc>, window_params = [{transform_indices = @transform_0, window_bounds = array<i64: 1, 64, 128>}, {transform_indices = @transform_1, window_bounds = array<i64: 1, 1, 16, 128>}, {pipeline_mode = #tpu.pipeline_mode<synchronous>, transform_indices = @transform_2, window_bounds = array<i64: 3, 128, 128>}, {pipeline_mode = #tpu.pipeline_mode<synchronous>, transform_indices = @transform_3, window_bounds = array<i64: 1, 128>}, {transform_indices = @transform_4, window_bounds = array<i64: 1, 64, 128>}]} {
    %c0 = arith.constant 0 : index
    %c0_0 = arith.constant 0 : index
    %c0_1 = arith.constant 0 : index
    %0 = vector.load %arg2[%c0, %c0_0, %c0_1] : memref<1x64x128xf32, #tpu.memory_space<vmem>>, vector<1x64x128xf32>
    %1 = vector.shape_cast %0 : vector<1x64x128xf32> to vector<64x128xf32>
    %c0_2 = arith.constant 0 : index
    %c0_3 = arith.constant 0 : index
    %c0_4 = arith.constant 0 : index
    %c0_5 = arith.constant 0 : index
    %2 = vector.load %arg3[%c0_2, %c0_3, %c0_4, %c0_5] : memref<1x1x16x128xf32, #tpu.memory_space<vmem>>, vector<1x1x16x128xf32>
    %3 = vector.shape_cast %2 : vector<1x1x16x128xf32> to vector<16x128xf32>
    %4 = vector.extract_strided_slice %3 {offsets = [0, 0], sizes = [8, 128], strides = [1, 1]} : vector<16x128xf32> to vector<8x128xf32>
    %5 = vector.extract_strided_slice %3 {offsets = [8, 0], sizes = [8, 128], strides = [1, 1]} : vector<16x128xf32> to vector<8x128xf32>
    %6 = vector.extract_strided_slice %1 {offsets = [0, 0], sizes = [56, 128], strides = [1, 1]} : vector<64x128xf32> to vector<56x128xf32>
    %7 = tpu.concatenate %4, %6 in 0 : vector<8x128xf32>, vector<56x128xf32> -> vector<64x128xf32>
    %8 = vector.extract_strided_slice %1 {offsets = [8, 0], sizes = [56, 128], strides = [1, 1]} : vector<64x128xf32> to vector<56x128xf32>
    %9 = tpu.concatenate %8, %5 in 0 : vector<56x128xf32>, vector<8x128xf32> -> vector<64x128xf32>
    %c0_6 = arith.constant 0 : index
    %c0_7 = arith.constant 0 : index
    %c0_8 = arith.constant 0 : index
    %10 = vector.load %arg4[%c0_6, %c0_7, %c0_8] : memref<3x128x128xf32, #tpu.memory_space<vmem>>, vector<1x128x128xf32>
    %11 = vector.shape_cast %10 : vector<1x128x128xf32> to vector<128x128xf32>
    %cst = arith.constant dense<0.000000e+00> : vector<64x128xf32>
    %12 = tpu.matmul %7, %11, %cst {dimension_numbers = #tpu.dot_dimension_numbers<[1], [0], [0], [1], [0, 0, 1, 1], [], []>} : vector<64x128xf32>, vector<128x128xf32>, vector<64x128xf32> -> vector<64x128xf32>
    %c1 = arith.constant 1 : index
    %c0_9 = arith.constant 0 : index
    %c0_10 = arith.constant 0 : index
    %13 = vector.load %arg4[%c1, %c0_9, %c0_10] : memref<3x128x128xf32, #tpu.memory_space<vmem>>, vector<1x128x128xf32>
    %14 = vector.shape_cast %13 : vector<1x128x128xf32> to vector<128x128xf32>
    %cst_11 = arith.constant dense<0.000000e+00> : vector<64x128xf32>
    %15 = tpu.matmul %1, %14, %cst_11 {dimension_numbers = #tpu.dot_dimension_numbers<[1], [0], [0], [1], [0, 0, 1, 1], [], []>} : vector<64x128xf32>, vector<128x128xf32>, vector<64x128xf32> -> vector<64x128xf32>
    %16 = arith.addf %12, %15 : vector<64x128xf32>
    %c2 = arith.constant 2 : index
    %c0_12 = arith.constant 0 : index
    %c0_13 = arith.constant 0 : index
    %17 = vector.load %arg4[%c2, %c0_12, %c0_13] : memref<3x128x128xf32, #tpu.memory_space<vmem>>, vector<1x128x128xf32>
    %18 = vector.shape_cast %17 : vector<1x128x128xf32> to vector<128x128xf32>
    %cst_14 = arith.constant dense<0.000000e+00> : vector<64x128xf32>
    %19 = tpu.matmul %9, %18, %cst_14 {dimension_numbers = #tpu.dot_dimension_numbers<[1], [0], [0], [1], [0, 0, 1, 1], [], []>} : vector<64x128xf32>, vector<128x128xf32>, vector<64x128xf32> -> vector<64x128xf32>
    %20 = arith.addf %16, %19 : vector<64x128xf32>
    %c0_15 = arith.constant 0 : index
    %c0_16 = arith.constant 0 : index
    %21 = vector.load %arg5[%c0_15, %c0_16] : memref<1x128xf32, #tpu.memory_space<vmem>>, vector<1x128xf32>
    %22 = vector.broadcast %21 : vector<1x128xf32> to vector<64x128xf32>
    %23 = arith.addf %20, %22 : vector<64x128xf32>
    %cst_17 = arith.constant 0.00999999977 : f32
    %24 = vector.broadcast %cst_17 : f32 to vector<64x128xf32>
    %25 = arith.mulf %24, %23 : vector<64x128xf32>
    %26 = arith.maximumf %23, %25 : vector<64x128xf32>
    %c0_18 = arith.constant 0 : index
    %c0_19 = arith.constant 0 : index
    %c0_20 = arith.constant 0 : index
    %27 = vector.load %arg6[%c0_18, %c0_19, %c0_20] : memref<1x64x128xf32, #tpu.memory_space<vmem>>, vector<1x64x128xf32>
    %28 = vector.shape_cast %27 : vector<1x64x128xf32> to vector<64x128xf32>
    %29 = vector.shape_cast %26 : vector<64x128xf32> to vector<1x64x128xf32>
    tpu.vector_store %arg6[%c0_18, %c0_19, %c0_20], %29 {strides = array<i32>} : memref<1x64x128xf32, #tpu.memory_space<vmem>>, vector<1x64x128xf32>,
    return
  }
  func.func @transform_0(%arg0: i32, %arg1: i32) -> (i32, i32, i32) {
    %c0_i32 = arith.constant 0 : i32
    %c0_i32_0 = arith.constant 0 : i32
    return %arg0, %arg1, %c0_i32 : i32, i32, i32
  }
  func.func @transform_1(%arg0: i32, %arg1: i32) -> (i32, i32, i32, i32) {
    %c0_i32 = arith.constant 0 : i32
    %c0_i32_0 = arith.constant 0 : i32
    %c0_i32_1 = arith.constant 0 : i32
    return %arg0, %arg1, %c0_i32, %c0_i32_0 : i32, i32, i32, i32
  }
  func.func @transform_2(%arg0: i32, %arg1: i32) -> (i32, i32, i32) {
    %c0_i32 = arith.constant 0 : i32
    %c0_i32_0 = arith.constant 0 : i32
    %c0_i32_1 = arith.constant 0 : i32
    %c0_i32_2 = arith.constant 0 : i32
    return %c0_i32, %c0_i32_0, %c0_i32_1 : i32, i32, i32
  }
  func.func @transform_3(%arg0: i32, %arg1: i32) -> (i32, i32) {
    %c0_i32 = arith.constant 0 : i32
    %c0_i32_0 = arith.constant 0 : i32
    %c0_i32_1 = arith.constant 0 : i32
    return %c0_i32, %c0_i32_0 : i32, i32
  }
  func.func @transform_4(%arg0: i32, %arg1: i32) -> (i32, i32, i32) {
    %c0_i32 = arith.constant 0 : i32
    %c0_i32_0 = arith.constant 0 : i32
    return %arg0, %arg1, %c0_i32 : i32, i32, i32
  }
}

</mosaic_0001>

<llo_original>
// kernel: tpu_custom_call.1
$region0: #{tpu_custom_call.1}
  #allocation0 [shape = 'u32[]', space=smem, size = 0x4, offset = 0x4, fixed_abs, tag = 'smem constant byte address 0x4 - core index']
  #allocation1 [shape = 'u32[72,128]{1,0:T(1,128)}', space=vmem, size = 0x9000, scoped, tag = 'internal scratch']
  %s0 = inlined_call_operand.hbm [shape: f32[2,128,128], index: 0, kind: input, shape index: {}]
  %s1 = inlined_call_operand.hbm [shape: f32[2,2,16,128], index: 1, kind: input, shape index: {}]
  %s2 = inlined_call_operand.hbm [shape: f32[3,128,128], index: 2, kind: input, shape index: {}]
  %s3 = inlined_call_operand.vmem [shape: f32[1,128], index: 3, kind: input, shape index: {}]
  %s4 = inlined_call_operand.hbm [shape: f32[2,128,128], index: 4, kind: output, shape index: {}]
  %s5 = sld [smem:[#allocation0]]
  $region61: #{tpu_custom_call.1} parent=0
    _
  %s7 = ssub.s32 1, %s5
  %s8 = scalar_select 0, %s7, %s5
  $region1: #{tpu_custom_call.1} parent=0
    #allocation2 [shape = 'u8[65536]{0}', space=vmem, size = 0x10000, scoped, tag = 'input window, operand 0']
    #allocation3 [shape = 's32[2]{0}', space=sflag, size = 0x8, scoped, tag = 'scoped memory for tpu_custom_call.1']
    #allocation4 [shape = 's32[2]{0}', space=sflag, size = 0x8, scoped, tag = 'scoped memory for tpu_custom_call.1']
    #allocation5 [shape = 'u8[16384]{0}', space=vmem, size = 0x4000, scoped, tag = 'input window, operand 1']
    #allocation6 [shape = 's32[2]{0}', space=sflag, size = 0x8, scoped, tag = 'scoped memory for tpu_custom_call.1']
    #allocation7 [shape = 'u8[196608]{0}', space=vmem, size = 0x30000, scoped, tag = 'input window, operand 2, single buffered']
    #allocation8 [shape = 'u8[65536]{0}', space=vmem, size = 0x10000, scoped, tag = 'output window, operand 0']
    %9 = vsyncpa [#allocation3], 0
    %s10 = scalar_lea.sflag [#allocation3], 1
    %11 = vsyncpa %s10, 0
    %12 = vsyncpa [#allocation6], 0
    %s13 = scalar_lea.sflag [#allocation6], 1
    %14 = vsyncpa %s13, 0
    %15 = vsyncpa [#allocation4], 0
    %s16 = scalar_lea.sflag [#allocation4], 1
    %17 = vsyncpa %s16, 0
    loop: start=0, step=1, limit=6
    $region2: #{tpu_custom_call.1} parent=1 // loop_pre_header
      _
    $region3: #{tpu_custom_call.1} parent=1 // loop_header
      %s19 = sphi 0, %s23
      %p20 = scmp.ge.s32.totalorder %s19, 6
      %s26 = sphi 0, %s38
      %s27 = sphi 0, %s34
      %s28 = sphi 0, %s26
      %s29 = sphi 0, %s27
      %s30 = sphi 0, %s28
      %s31 = sphi 0, %s29
      %s43 = sphi 0, %s45
      %s46 = sphi 0, %s43
      %s47 = sphi 0, %s46
      %s63 = sphi 0, %s47
      %s71 = sphi 0, %s73
      %s74 = sphi 0, %s71
      %s75 = sphi 0, %s74
      %s91 = sphi 0, %s75
      %s95 = sphi 0, %s95
      %s97 = sphi 0, %s95
      %s98 = sphi 0, %s97
      %s112 = sphi 0, %s98
      %s116 = sphi 0, %s116
      %s118 = sphi 0, %s116
      %s119 = sphi 0, %s118
      %s133 = sphi 0, %s119
      %s141 = sphi 0, %s143
      %s144 = sphi 0, %s141
      %s145 = sphi 0, %s144
      %s161 = sphi 0, %s145
    $region4: #{tpu_custom_call.1} parent=1 // loop_header_branch
      %22 = sbr.rel (%p20) target = $region8
    $region5: #{tpu_custom_call.1} parent=1 // loop_body
      %s24 = ssub.s32 %s19, 1
      %s25 = ssub.s32 %s19, 2
      %s32 = sadd.s32 1, %s27
      %p33 = scmp.ge.s32.totalorder %s32, 2
      %s34 = scalar_select %p33, 0, %s32
      %s35 = sadd.s32 1, %s26
      %s36 = scalar_select %p33, %s35, %s26
      %p37 = scmp.ge.s32.totalorder %s36, 2
      %s38 = scalar_select %p37, 0, %s36
      %s39 = ssub.s32 %s26, %s38
      %s40 = ssub.s32 %s27, %s34
      %s41 = sor.u32 %s39, %s40
      %p42 = scmp.eq.s32.totalorder %s41, 0
      %s44 = sadd.s32 %s43, 1
      %s45 = scalar_select %p42, %s43, %s44
      %p48 = pneg %p42
      %p49 = scmp.eq.s32.totalorder %s19, 3
      %p50 = por %p48, %p49
      %p51 = scmp.ne.s32.totalorder %s43, %s46
      %p52 = scmp.eq.s32.totalorder %s19, 0
      %p53 = por %p51, %p52
      %p54 = scmp.ne.s32.totalorder %s43, %s46
      %p55 = scmp.eq.s32.totalorder %s24, 3
      %p56 = por %p54, %p55
      %p57 = scmp.ne.s32.totalorder %s46, %s47
      %p58 = scmp.eq.s32.totalorder %s24, 0
      %p59 = por %p57, %p58
      %p60 = scmp.ne.s32.totalorder %s46, %s47
      %p61 = scmp.eq.s32.totalorder %s25, 3
      %p62 = por %p60, %p61
      %p64 = scmp.ne.s32.totalorder %s47, %s63
      %p65 = scmp.eq.s32.totalorder %s25, 0
      %p66 = por %p64, %p65
      %s67 = ssub.s32 %s26, %s38
      %s68 = ssub.s32 %s27, %s34
      %s69 = sor.u32 %s67, %s68
      %p70 = scmp.eq.s32.totalorder %s69, 0
      %s72 = sadd.s32 %s71, 1
      %s73 = scalar_select %p70, %s71, %s72
      %p76 = pneg %p70
      %p77 = scmp.eq.s32.totalorder %s19, 3
      %p78 = por %p76, %p77
      %p79 = scmp.ne.s32.totalorder %s71, %s74
      %p80 = scmp.eq.s32.totalorder %s19, 0
      %p81 = por %p79, %p80
      %p82 = scmp.ne.s32.totalorder %s71, %s74
      %p83 = scmp.eq.s32.totalorder %s24, 3
      %p84 = por %p82, %p83
      %p85 = scmp.ne.s32.totalorder %s74, %s75
      %p86 = scmp.eq.s32.totalorder %s24, 0
      %p87 = por %p85, %p86
      %p88 = scmp.ne.s32.totalorder %s74, %s75
      %p89 = scmp.eq.s32.totalorder %s25, 3
      %p90 = por %p88, %p89
      %p92 = scmp.ne.s32.totalorder %s75, %s91
      %p93 = scmp.eq.s32.totalorder %s25, 0
      %p94 = por %p92, %p93
      %s96 = sadd.s32 %s95, 1
      %p99 = scmp.eq.s32.totalorder %s19, 3
      %p100 = scmp.ne.s32.totalorder %s95, %s97
      %p101 = scmp.eq.s32.totalorder %s19, 0
      %p102 = por %p100, %p101
      %p103 = scmp.ne.s32.totalorder %s95, %s97
      %p104 = scmp.eq.s32.totalorder %s24, 3
      %p105 = por %p103, %p104
      %p106 = scmp.ne.s32.totalorder %s97, %s98
      %p107 = scmp.eq.s32.totalorder %s24, 0
      %p108 = por %p106, %p107
      %p109 = scmp.ne.s32.totalorder %s97, %s98
      %p110 = scmp.eq.s32.totalorder %s25, 3
      %p111 = por %p109, %p110
      %p113 = scmp.ne.s32.totalorder %s98, %s112
      %p114 = scmp.eq.s32.totalorder %s25, 0
      %p115 = por %p113, %p114
      %s117 = sadd.s32 %s116, 1
      %p120 = scmp.eq.s32.totalorder %s19, 3
      %p121 = scmp.ne.s32.totalorder %s116, %s118
      %p122 = scmp.eq.s32.totalorder %s19, 0
      %p123 = por %p121, %p122
      %p124 = scmp.ne.s32.totalorder %s116, %s118
      %p125 = scmp.eq.s32.totalorder %s24, 3
      %p126 = por %p124, %p125
      %p127 = scmp.ne.s32.totalorder %s118, %s119
      %p128 = scmp.eq.s32.totalorder %s24, 0
      %p129 = por %p127, %p128
      %p130 = scmp.ne.s32.totalorder %s118, %s119
      %p131 = scmp.eq.s32.totalorder %s25, 3
      %p132 = por %p130, %p131
      %p134 = scmp.ne.s32.totalorder %s119, %s133
      %p135 = scmp.eq.s32.totalorder %s25, 0
      %p136 = por %p134, %p135
      %s137 = ssub.s32 %s26, %s38
      %s138 = ssub.s32 %s27, %s34
      %s139 = sor.u32 %s137, %s138
      %p140 = scmp.eq.s32.totalorder %s139, 0
      %s142 = sadd.s32 %s141, 1
      %s143 = scalar_select %p140, %s141, %s142
      %p146 = pneg %p140
      %p147 = scmp.eq.s32.totalorder %s19, 3
      %p148 = por %p146, %p147
      %p149 = scmp.ne.s32.totalorder %s141, %s144
      %p150 = scmp.eq.s32.totalorder %s19, 0
      %p151 = por %p149, %p150
      %p152 = scmp.ne.s32.totalorder %s141, %s144
      %p153 = scmp.eq.s32.totalorder %s24, 3
      %p154 = por %p152, %p153
      %p155 = scmp.ne.s32.totalorder %s144, %s145
      %p156 = scmp.eq.s32.totalorder %s24, 0
      %p157 = por %p155, %p156
      %p158 = scmp.ne.s32.totalorder %s144, %s145
      %p159 = scmp.eq.s32.totalorder %s25, 3
      %p160 = por %p158, %p159
      %p162 = scmp.ne.s32.totalorder %s145, %s161
      %p163 = scmp.eq.s32.totalorder %s25, 0
      %p164 = por %p162, %p163
      %p165 = scmp.le.s32.totalorder 1, %s19
      %p166 = scmp.lt.s32.totalorder %s19, 5
      %p167 = pnand %p165, %p166
      %p168 = pneg %p167
      // Predicated region
      $region9: #{tpu_custom_call.1} parent=5 // pred_check
        _
      $region10: #{tpu_custom_call.1} parent=5 // pred_check_branch
        %170 = sbr.rel (%p167) target = $region12
      $region11: #{tpu_custom_call.1} parent=5 // pred_region
        %s171 = ssub.s32 %s19, 1
        // Predicated region
        $region13: #{tpu_custom_call.1} parent=11 // pred_check
          %p172 = pneg %p108
        $region14: #{tpu_custom_call.1} parent=11 // pred_check_branch
          %174 = sbr.rel (%p172) target = $region16
        $region15: #{tpu_custom_call.1} parent=11 // pred_region
          %176 = vsyncadd [#allocation6], 0
          %s177 = sshll.u32 %s2, 4
          %s178 = int_to_ptr.hbm [resolvable:$true] %s177
          %s179 = sshll.u32 [#allocation7], 4
          %s180 = int_to_ptr.vmem [resolvable:$true] %s179
          %185 = dma.hbm_to_vmem [thread:$0]  %s178, 6144, %s180, [#allocation6], 128, 128, 8
        $region16: #{tpu_custom_call.1} parent=11 // pred_fallthru
          _
        // Predicated region
        $region17: #{tpu_custom_call.1} parent=11 // pred_check
          %p186 = pneg %p129
        $region18: #{tpu_custom_call.1} parent=11 // pred_check_branch
          %188 = sbr.rel (%p186) target = $region20
        $region19: #{tpu_custom_call.1} parent=11 // pred_region
          _
        $region20: #{tpu_custom_call.1} parent=11 // pred_fallthru
          _
      $region12: #{tpu_custom_call.1} parent=5 // pred_fallthru
        _
      %p189 = scmp.lt.s32.totalorder %s19, 4
      // Predicated region
      $region21: #{tpu_custom_call.1} parent=5 // pred_check
        %p190 = pneg %p189
      $region22: #{tpu_custom_call.1} parent=5 // pred_check_branch
        %192 = sbr.rel (%p190) target = $region24
      $region23: #{tpu_custom_call.1} parent=5 // pred_region
        // Predicated region
        $region25: #{tpu_custom_call.1} parent=23 // pred_check
          %p193 = pneg %p53
        $region26: #{tpu_custom_call.1} parent=23 // pred_check_branch
          %195 = sbr.rel (%p193) target = $region28
        $region27: #{tpu_custom_call.1} parent=23 // pred_region
          %s196 = sand.u32 %s43, 1
          %s197 = scalar_lea.sflag [#allocation3], %s196
          %s198 = sand.u32 %s43, 1
          %s199 = smul.addr %s198, 64
          %s200 = scalar_lea.vmem [#allocation2], %s199
          %s201 = smul.u32 8, %s27
          %203 = vsyncadd %s197, 0
          %s204 = smul.addr %s26, 16
          %s205 = sadd.s32 %s201, %s204
          %s206 = smul.addr %s205, 8
          %s207 = scalar_lea.hbm %s0, %s206
          %s208 = sshll.u32 %s207, 4
          %s209 = int_to_ptr.hbm [resolvable:$true] %s208
          %s210 = sshll.u32 %s200, 4
          %s211 = int_to_ptr.vmem [resolvable:$true] %s210
          %216 = dma.hbm_to_vmem [thread:$0]  %s209, 1024, %s211, %s197, 128, 128, 8
        $region28: #{tpu_custom_call.1} parent=23 // pred_fallthru
          _
        // Predicated region
        $region29: #{tpu_custom_call.1} parent=23 // pred_check
          %p217 = pneg %p81
        $region30: #{tpu_custom_call.1} parent=23 // pred_check_branch
          %219 = sbr.rel (%p217) target = $region32
        $region31: #{tpu_custom_call.1} parent=23 // pred_region
          %s220 = sand.u32 %s19, 1
          %s221 = scalar_lea.sflag [#allocation6], %s220
          %s222 = sand.u32 %s71, 1
          %s223 = smul.addr %s222, 16
          %s224 = scalar_lea.vmem [#allocation5], %s223
          %226 = vsyncadd %s221, 0
          %s227 = smul.addr %s27, 2
          %s228 = smul.addr %s26, 4
          %s229 = sadd.s32 %s227, %s228
          %s230 = smul.addr %s229, 8
          %s231 = scalar_lea.hbm %s1, %s230
          %s232 = sshll.u32 %s231, 4
          %s233 = int_to_ptr.hbm [resolvable:$true] %s232
          %s234 = sshll.u32 %s224, 4
          %s235 = int_to_ptr.vmem [resolvable:$true] %s234
          %240 = dma.hbm_to_vmem [thread:$0]  %s233, 256, %s235, %s221, 128, 128, 8
        $region32: #{tpu_custom_call.1} parent=23 // pred_fallthru
          _
      $region24: #{tpu_custom_call.1} parent=5 // pred_fallthru
        _
      %p241 = scmp.le.s32.totalorder 1, %s19
      %p242 = scmp.lt.s32.totalorder %s19, 5
      %p243 = pnand %p241, %p242
      %p244 = pneg %p243
      // Predicated region
      $region33: #{tpu_custom_call.1} parent=5 // pred_check
        _
      $region34: #{tpu_custom_call.1} parent=5 // pred_check_branch
        %246 = sbr.rel (%p243) target = $region36
      $region35: #{tpu_custom_call.1} parent=5 // pred_region
        %s247 = ssub.s32 %s19, 1
        %s248 = sand.u32 %s46, 1
        %s249 = scalar_lea.sflag [#allocation3], %s248
        %s250 = sand.u32 %s46, 1
        %s251 = smul.addr %s250, 64
        %s252 = scalar_lea.vmem [#allocation2], %s251
        // Predicated region
        $region37: #{tpu_custom_call.1} parent=35 // pred_check
          %p253 = pneg %p59
        $region38: #{tpu_custom_call.1} parent=35 // pred_check_branch
          %255 = sbr.rel (%p253) target = $region40
        $region39: #{tpu_custom_call.1} parent=35 // pred_region
          %257 = dma.done %s249, 1024
        $region40: #{tpu_custom_call.1} parent=35 // pred_fallthru
          _
        %s258 = sand.u32 %s24, 1
        %s259 = scalar_lea.sflag [#allocation6], %s258
        %s260 = sand.u32 %s74, 1
        %s261 = smul.addr %s260, 16
        %s262 = scalar_lea.vmem [#allocation5], %s261
        // Predicated region
        $region41: #{tpu_custom_call.1} parent=35 // pred_check
          %p263 = pneg %p87
        $region42: #{tpu_custom_call.1} parent=35 // pred_check_branch
          %265 = sbr.rel (%p263) target = $region44
        $region43: #{tpu_custom_call.1} parent=35 // pred_region
          %267 = dma.done %s259, 256
        $region44: #{tpu_custom_call.1} parent=35 // pred_fallthru
          _
        // Predicated region
        $region45: #{tpu_custom_call.1} parent=35 // pred_check
          %p268 = pneg %p108
        $region46: #{tpu_custom_call.1} parent=35 // pred_check_branch
          %270 = sbr.rel (%p268) target = $region48
        $region47: #{tpu_custom_call.1} parent=35 // pred_region
          %272 = dma.done [#allocation6], 6144
        $region48: #{tpu_custom_call.1} parent=35 // pred_fallthru
          _
        %s273 = sand.u32 %s46, 1
        %s274 = scalar_lea.sflag [#allocation3], %s273
        %s275 = sand.u32 %s46, 1
        %s276 = smul.addr %s275, 64
        %s277 = scalar_lea.vmem [#allocation2], %s276
        %p278 = pneg %p59
        %p279 = pneg %p56
        %s280 = sand.u32 %s24, 1
        %s281 = scalar_lea.sflag [#allocation6], %s280
        %s282 = sand.u32 %s74, 1
        %s283 = smul.addr %s282, 16
        %s284 = scalar_lea.vmem [#allocation5], %s283
        %p285 = pneg %p87
        %p286 = pneg %p84
        %p287 = pneg %p108
        %p288 = pneg %p105
        %p289 = pneg %p129
        %p290 = pneg %p126
        %p291 = pneg %p157
        %p292 = pneg %p154
        %s293 = sand.u32 %s144, 1
        %s294 = scalar_lea.sflag [#allocation4], %s293
        %s295 = sand.u32 %s144, 1
        %s296 = smul.addr %s295, 64
        %s297 = scalar_lea.vmem [#allocation8], %s296
        %s298 = smul.u32 8, %s29
        %s299 = smul.u32 8, %s29
        %v300 = vld [vmem:[%s252] sm:$0xff]
        %v301 = vld [vmem:[%s252 + $0x8] sm:$0xff]
        %v302 = vld [vmem:[%s252 + $0x10] sm:$0xff]
        %v303 = vld [vmem:[%s252 + $0x18] sm:$0xff]
        %v304 = vld [vmem:[%s252 + $0x20] sm:$0xff]
        %v305 = vld [vmem:[%s252 + $0x28] sm:$0xff]
        %v306 = vld [vmem:[%s252 + $0x30] sm:$0xff]
        %v307 = vld [vmem:[%s252 + $0x38] sm:$0xff]
        %v308 = vld [vmem:[%s262] sm:$0xff]
        %v309 = vld [vmem:[%s262 + $0x8] sm:$0xff]
        %v310 = vld [vmem:[#allocation7] sm:$0xff]
        %v311 = vld [vmem:[#allocation7 + $0x8] sm:$0xff]
        %v312 = vld [vmem:[#allocation7 + $0x10] sm:$0xff]
        %v313 = vld [vmem:[#allocation7 + $0x18] sm:$0xff]
        %v314 = vld [vmem:[#allocation7 + $0x20] sm:$0xff]
        %v315 = vld [vmem:[#allocation7 + $0x28] sm:$0xff]
        %v316 = vld [vmem:[#allocation7 + $0x30] sm:$0xff]
        %v317 = vld [vmem:[#allocation7 + $0x38] sm:$0xff]
        %v318 = vld [vmem:[#allocation7 + $0x40] sm:$0xff]
        %v319 = vld [vmem:[#allocation7 + $0x48] sm:$0xff]
        %v320 = vld [vmem:[#allocation7 + $0x50] sm:$0xff]
        %v321 = vld [vmem:[#allocation7 + $0x58] sm:$0xff]
        %v322 = vld [vmem:[#allocation7 + $0x60] sm:$0xff]
        %v323 = vld [vmem:[#allocation7 + $0x68] sm:$0xff]
        %v324 = vld [vmem:[#allocation7 + $0x70] sm:$0xff]
        %v325 = vld [vmem:[#allocation7 + $0x78] sm:$0xff]
        %s326 = scalar_lea.vmem [#allocation7], 128
        %v327 = vld [vmem:[%s326] sm:$0xff]
        %v328 = vld [vmem:[%s326 + $0x8] sm:$0xff]
        %v329 = vld [vmem:[%s326 + $0x10] sm:$0xff]
        %v330 = vld [vmem:[%s326 + $0x18] sm:$0xff]
        %v331 = vld [vmem:[%s326 + $0x20] sm:$0xff]
        %v332 = vld [vmem:[%s326 + $0x28] sm:$0xff]
        %v333 = vld [vmem:[%s326 + $0x30] sm:$0xff]
        %v334 = vld [vmem:[%s326 + $0x38] sm:$0xff]
        %v335 = vld [vmem:[%s326 + $0x40] sm:$0xff]
        %v336 = vld [vmem:[%s326 + $0x48] sm:$0xff]
        %v337 = vld [vmem:[%s326 + $0x50] sm:$0xff]
        %v338 = vld [vmem:[%s326 + $0x58] sm:$0xff]
        %v339 = vld [vmem:[%s326 + $0x60] sm:$0xff]
        %v340 = vld [vmem:[%s326 + $0x68] sm:$0xff]
        %v341 = vld [vmem:[%s326 + $0x70] sm:$0xff]
        %v342 = vld [vmem:[%s326 + $0x78] sm:$0xff]
        %343 = vmatpush.msra.mxu0 %v342
        %344 = vmatpush.msra.mxu0 %v341
        %345 = vmatpush.msra.mxu0 %v340
        %346 = vmatpush.msra.mxu0 %v339
        %347 = vmatpush.msra.mxu0 %v338
        %348 = vmatpush.msra.mxu0 %v337
        %349 = vmatpush.msra.mxu0 %v336
        %350 = vmatpush.msra.mxu0 %v335
        %351 = vmatpush.msra.mxu0 %v334
        %352 = vmatpush.msra.mxu0 %v333
        %353 = vmatpush.msra.mxu0 %v332
        %354 = vmatpush.msra.mxu0 %v331
        %355 = vmatpush.msra.mxu0 %v330
        %356 = vmatpush.msra.mxu0 %v329
        %357 = vmatpush.msra.mxu0 %v328
        %358 = vmatpush.msra.mxu0 %v327
        %359 = vmatmul.f32.gmra.mxu0 %v300
        %v360 = vpop.f32.mrf.mxu0
        %v361 = vadd.f32 0.0, %v360
        %362 = vmatmul.f32.gmra.mxu0 %v301
        %v363 = vpop.f32.mrf.mxu0
        %v364 = vadd.f32 0.0, %v363
        %365 = vmatmul.f32.gmra.mxu0 %v302
        %v366 = vpop.f32.mrf.mxu0
        %v367 = vadd.f32 0.0, %v366
        %368 = vmatmul.f32.gmra.mxu0 %v303
        %v369 = vpop.f32.mrf.mxu0
        %v370 = vadd.f32 0.0, %v369
        %371 = vmatmul.f32.gmra.mxu0 %v304
        %v372 = vpop.f32.mrf.mxu0
        %v373 = vadd.f32 0.0, %v372
        %374 = vmatmul.f32.gmra.mxu0 %v305
        %v375 = vpop.f32.mrf.mxu0
        %v376 = vadd.f32 0.0, %v375
        %377 = vmatmul.f32.gmra.mxu0 %v306
        %v378 = vpop.f32.mrf.mxu0
        %v379 = vadd.f32 0.0, %v378
        %380 = vmatmul.f32.gmra.mxu0 %v307
        %v381 = vpop.f32.mrf.mxu0
        %v382 = vadd.f32 0.0, %v381
        %383 = vdwg.mxu0
        %384 = vmatpush.msra.mxu0 %v325
        %385 = vmatpush.msra.mxu0 %v324
        %386 = vmatpush.msra.mxu0 %v323
        %387 = vmatpush.msra.mxu0 %v322
        %388 = vmatpush.msra.mxu0 %v321
        %389 = vmatpush.msra.mxu0 %v320
        %390 = vmatpush.msra.mxu0 %v319
        %391 = vmatpush.msra.mxu0 %v318
        %392 = vmatpush.msra.mxu0 %v317
        %393 = vmatpush.msra.mxu0 %v316
        %394 = vmatpush.msra.mxu0 %v315
        %395 = vmatpush.msra.mxu0 %v314
        %396 = vmatpush.msra.mxu0 %v313
        %397 = vmatpush.msra.mxu0 %v312
        %398 = vmatpush.msra.mxu0 %v311
        %399 = vmatpush.msra.mxu0 %v310
        %400 = vmatmul.f32.gmra.mxu0 %v308
        %v401 = vpop.f32.mrf.mxu0
        %v402 = vadd.f32 %v361, %v401
        %403 = vmatmul.f32.gmra.mxu0 %v300
        %v404 = vpop.f32.mrf.mxu0
        %v405 = vadd.f32 %v364, %v404
        %406 = vmatmul.f32.gmra.mxu0 %v301
        %v407 = vpop.f32.mrf.mxu0
        %v408 = vadd.f32 %v367, %v407
        %409 = vmatmul.f32.gmra.mxu0 %v302
        %v410 = vpop.f32.mrf.mxu0
        %v411 = vadd.f32 %v370, %v410
        %412 = vmatmul.f32.gmra.mxu0 %v303
        %v413 = vpop.f32.mrf.mxu0
        %v414 = vadd.f32 %v373, %v413
        %415 = vmatmul.f32.gmra.mxu0 %v304
        %v416 = vpop.f32.mrf.mxu0
        %v417 = vadd.f32 %v376, %v416
        %418 = vmatmul.f32.gmra.mxu0 %v305
        %v419 = vpop.f32.mrf.mxu0
        %v420 = vadd.f32 %v379, %v419
        %421 = vmatmul.f32.gmra.mxu0 %v306
        %v422 = vpop.f32.mrf.mxu0
        %v423 = vadd.f32 %v382, %v422
        %424 = vdwg.mxu0
        %s425 = scalar_lea.vmem [#allocation7], 256
        %v426 = vld [vmem:[%s425] sm:$0xff]
        %v427 = vld [vmem:[%s425 + $0x8] sm:$0xff]
        %v428 = vld [vmem:[%s425 + $0x10] sm:$0xff]
        %v429 = vld [vmem:[%s425 + $0x18] sm:$0xff]
        %v430 = vld [vmem:[%s425 + $0x20] sm:$0xff]
        %v431 = vld [vmem:[%s425 + $0x28] sm:$0xff]
        %v432 = vld [vmem:[%s425 + $0x30] sm:$0xff]
        %v433 = vld [vmem:[%s425 + $0x38] sm:$0xff]
        %v434 = vld [vmem:[%s425 + $0x40] sm:$0xff]
        %v435 = vld [vmem:[%s425 + $0x48] sm:$0xff]
        %v436 = vld [vmem:[%s425 + $0x50] sm:$0xff]
        %v437 = vld [vmem:[%s425 + $0x58] sm:$0xff]
        %v438 = vld [vmem:[%s425 + $0x60] sm:$0xff]
        %v439 = vld [vmem:[%s425 + $0x68] sm:$0xff]
        %v440 = vld [vmem:[%s425 + $0x70] sm:$0xff]
        %v441 = vld [vmem:[%s425 + $0x78] sm:$0xff]
        %442 = vmatpush.msra.mxu0 %v441
        %443 = vmatpush.msra.mxu0 %v440
        %444 = vmatpush.msra.mxu0 %v439
        %445 = vmatpush.msra.mxu0 %v438
        %446 = vmatpush.msra.mxu0 %v437
        %447 = vmatpush.msra.mxu0 %v436
        %448 = vmatpush.msra.mxu0 %v435
        %449 = vmatpush.msra.mxu0 %v434
        %450 = vmatpush.msra.mxu0 %v433
        %451 = vmatpush.msra.mxu0 %v432
        %452 = vmatpush.msra.mxu0 %v431
        %453 = vmatpush.msra.mxu0 %v430
        %454 = vmatpush.msra.mxu0 %v429
        %455 = vmatpush.msra.mxu0 %v428
        %456 = vmatpush.msra.mxu0 %v427
        %457 = vmatpush.msra.mxu0 %v426
        %458 = vmatmul.f32.gmra.mxu0 %v301
        %v459 = vpop.f32.mrf.mxu0
        %v460 = vadd.f32 0.0, %v459
        %461 = vmatmul.f32.gmra.mxu0 %v302
        %v462 = vpop.f32.mrf.mxu0
        %v463 = vadd.f32 0.0, %v462
        %464 = vmatmul.f32.gmra.mxu0 %v303
        %v465 = vpop.f32.mrf.mxu0
        %v466 = vadd.f32 0.0, %v465
        %467 = vmatmul.f32.gmra.mxu0 %v304
        %v468 = vpop.f32.mrf.mxu0
        %v469 = vadd.f32 0.0, %v468
        %470 = vmatmul.f32.gmra.mxu0 %v305
        %v471 = vpop.f32.mrf.mxu0
        %v472 = vadd.f32 0.0, %v471
        %473 = vmatmul.f32.gmra.mxu0 %v306
        %v474 = vpop.f32.mrf.mxu0
        %v475 = vadd.f32 0.0, %v474
        %476 = vmatmul.f32.gmra.mxu0 %v307
        %v477 = vpop.f32.mrf.mxu0
        %v478 = vadd.f32 0.0, %v477
        %479 = vmatmul.f32.gmra.mxu0 %v309
        %v480 = vpop.f32.mrf.mxu0
        %v481 = vadd.f32 0.0, %v480
        %482 = vdwg.mxu0
        %v483 = vadd.f32 %v402, %v460
        %v484 = vadd.f32 %v405, %v463
        %v485 = vadd.f32 %v408, %v466
        %v486 = vadd.f32 %v411, %v469
        %v487 = vadd.f32 %v414, %v472
        %v488 = vadd.f32 %v417, %v475
        %v489 = vadd.f32 %v420, %v478
        %v490 = vadd.f32 %v423, %v481
        %v491 = vld [vmem:[%s3] sm:$0x1]
        %v493 = vperm.slane %v491, 0
        %v495 = vadd.f32 %v483, %v493
        %v496 = vadd.f32 %v484, %v493
        %v497 = vadd.f32 %v485, %v493
        %v498 = vadd.f32 %v486, %v493
        %v499 = vadd.f32 %v487, %v493
        %v500 = vadd.f32 %v488, %v493
        %v501 = vadd.f32 %v489, %v493
        %v502 = vadd.f32 %v490, %v493
        %v503 = vmul.f32 %v495, 0.01
        %v504 = vmul.f32 %v496, 0.01
        %v505 = vmul.f32 %v497, 0.01
        %v506 = vmul.f32 %v498, 0.01
        %v507 = vmul.f32 %v499, 0.01
        %v508 = vmul.f32 %v500, 0.01
        %v509 = vmul.f32 %v501, 0.01
        %v510 = vmul.f32 %v502, 0.01
        %v511 = vmax.f32 %v495, %v503
        %v512 = vmax.f32 %v496, %v504
        %v513 = vmax.f32 %v497, %v505
        %v514 = vmax.f32 %v498, %v506
        %v515 = vmax.f32 %v499, %v507
        %v516 = vmax.f32 %v500, %v508
        %v517 = vmax.f32 %v501, %v509
        %v518 = vmax.f32 %v502, %v510
        %519 = vst [vmem:[%s297] sm:$0xff] %v511
        %520 = vst [vmem:[%s297 + $0x8] sm:$0xff] %v512
        %521 = vst [vmem:[%s297 + $0x10] sm:$0xff] %v513
        %522 = vst [vmem:[%s297 + $0x18] sm:$0xff] %v514
        %523 = vst [vmem:[%s297 + $0x20] sm:$0xff] %v515
        %524 = vst [vmem:[%s297 + $0x28] sm:$0xff] %v516
        %525 = vst [vmem:[%s297 + $0x30] sm:$0xff] %v517
        %526 = vst [vmem:[%s297 + $0x38] sm:$0xff] %v518
        %s527 = sand.u32 %s144, 1
        %s528 = scalar_lea.sflag [#allocation4], %s527
        %s529 = sand.u32 %s144, 1
        %s530 = smul.addr %s529, 64
        %s531 = scalar_lea.vmem [#allocation8], %s530
        // Predicated region
        $region49: #{tpu_custom_call.1} parent=35 // pred_check
          %p532 = pneg %p154
        $region50: #{tpu_custom_call.1} parent=35 // pred_check_branch
          %534 = sbr.rel (%p532) target = $region52
        $region51: #{tpu_custom_call.1} parent=35 // pred_region
          %s535 = smul.u32 8, %s29
          %537 = vsyncadd %s528, 0
          %s538 = smul.addr %s28, 16
          %s539 = sadd.s32 %s535, %s538
          %s540 = smul.addr %s539, 8
          %s541 = scalar_lea.hbm %s4, %s540
          %s542 = sshll.u32 %s531, 4
          %s543 = int_to_ptr.vmem [resolvable:$true] %s542
          %s544 = sshll.u32 %s541, 4
          %s545 = int_to_ptr.hbm [resolvable:$true] %s544
          %550 = dma.vmem_to_hbm [thread:$0]  %s543, 1024, %s545, %s528, 128, 128, 8
        $region52: #{tpu_custom_call.1} parent=35 // pred_fallthru
          _
      $region36: #{tpu_custom_call.1} parent=5 // pred_fallthru
        _
      %p551 = scmp.le.s32.totalorder 2, %s19
      // Predicated region
      $region53: #{tpu_custom_call.1} parent=5 // pred_check
        %p552 = pneg %p551
      $region54: #{tpu_custom_call.1} parent=5 // pred_check_branch
        %554 = sbr.rel (%p552) target = $region56
      $region55: #{tpu_custom_call.1} parent=5 // pred_region
        %s555 = ssub.s32 %s19, 2
        // Predicated region
        $region57: #{tpu_custom_call.1} parent=55 // pred_check
          %p556 = pneg %p160
        $region58: #{tpu_custom_call.1} parent=55 // pred_check_branch
          %558 = sbr.rel (%p556) target = $region60
        $region59: #{tpu_custom_call.1} parent=55 // pred_region
          %s559 = sand.u32 %s145, 1
          %s560 = scalar_lea.sflag [#allocation4], %s559
          %s561 = sand.u32 %s145, 1
          %s562 = smul.addr %s561, 64
          %s563 = scalar_lea.vmem [#allocation8], %s562
          %565 = dma.done %s560, 1024
        $region60: #{tpu_custom_call.1} parent=55 // pred_fallthru
          _
      $region56: #{tpu_custom_call.1} parent=5 // pred_fallthru
        _
    $region6: #{tpu_custom_call.1} parent=1 // loop_footer
      %s23 = sadd.s32 1, %s19
    $region7: #{tpu_custom_call.1} parent=1 // loop_footer_branch
      %18 = sbr.rel target = $region3
    $region8: #{tpu_custom_call.1} parent=1 // loop_exit
      _
    %566 = vsyncpa [#allocation3], 1
    %s567 = scalar_lea.sflag [#allocation3], 1
    %568 = vsyncpa %s567, 1
    %569 = vsyncpa [#allocation6], 1
    %s570 = scalar_lea.sflag [#allocation6], 1
    %571 = vsyncpa %s570, 1
    %572 = vsyncpa [#allocation4], 1
    %s573 = scalar_lea.sflag [#allocation4], 1
    %574 = vsyncpa %s573, 1

</llo_original>
